<compile_context>
chip_gen: v7x
topology: tpu7x:2x2x1
jax: 0.10.0
libtpu: 0.0.40
codegen_flags: <defaults>
</compile_context>

<pallas_src>
import functools
import math

import jax
import jax.numpy as jnp
from jax.experimental import pallas as pl
from jax.experimental.pallas import tpu as pltpu


def _optimizee_kernel(*refs, num_stacks, hidden_size, inv_p, exp_p,
                      update_scale, zero_state, mxu_dtype):
    """Single-timestep stacked-LSTM optimizee step for one batch tile.

    zero_state=True  refs: grad, x, w_in0, w_rest, bias, w_lin, b_lin,
                           newx_out, state_out
    zero_state=False refs: grad, x, state_slab, w_in0, w_rest, bias, w_lin,
                           b_lin, newx_out, state_out
    state slab layout (lane-dense): [h_0 | ... | h_{L-1} | c_0 | ... | c_{L-1}]
    """
    H = hidden_size
    L = num_stacks
    if zero_state:
        (grad_ref, x_ref,
         w_in0_ref, w_rest_ref, bias_ref, wlin_ref, blin_ref,
         newx_ref, state_out_ref) = refs
        state = None
    else:
        (grad_ref, x_ref, state_ref,
         w_in0_ref, w_rest_ref, bias_ref, wlin_ref, blin_ref,
         newx_ref, state_out_ref) = refs
        state = state_ref[...].astype(jnp.float32)

    # --- LogAndSign preprocessing (elementwise VPU/EUP; constants baked) -----
    g = grad_ref[...].astype(jnp.float32)
    clamp_log = jnp.clip(jnp.log(jnp.abs(g)) * inv_p, -1.0, 1.0)
    clamp_sign = jnp.clip(exp_p * g, -1.0, 1.0)

    # --- stacked LSTM cells, single timestep: ONE MXU dot per layer ----------
    h_outs, c_outs = [], []
    layer_in = None
    for l in range(L):
        if l == 0:
            parts = [clamp_log, clamp_sign]
            w = w_in0_ref[...]
        else:
            parts = [layer_in]
            w = w_rest_ref[l - 1]
        if not zero_state:
            parts.append(state[:, l * H:(l + 1) * H])          # h_prev_l
        lhs = parts[0] if len(parts) == 1 else jnp.concatenate(parts, axis=-1)
        gates = jnp.dot(lhs.astype(mxu_dtype), w,
                        preferred_element_type=jnp.float32) + bias_ref[l]

        # one whole-slab sigmoid; the g-gate tanh is recovered from the
        # pre-scaled (x2) column via tanh(z) = 2*sigmoid(2z) - 1 (one VPU FMA),
        # eliminating the full 4H-wide tanh pass over the gate slab.
        sig = jax.nn.sigmoid(gates)
        i_g = sig[:, 0 * H:1 * H]
        f_g = sig[:, 1 * H:2 * H]
        g_g = 2.0 * sig[:, 2 * H:3 * H] - 1.0
        o_g = sig[:, 3 * H:4 * H]

        if zero_state:
            c_new = i_g * g_g                       # f*c0 elided (c0 == 0)
        else:
            c_prev = state[:, (L + l) * H:(L + l + 1) * H]
            c_new = f_g * c_prev + i_g * g_g
        h_new = o_g * jnp.tanh(c_new)

        h_outs.append(h_new)
        c_outs.append(c_new)
        layer_in = h_new

    # lane-dense (TB, 2*L*H) state slab -> single unmasked store
    state_out_ref[...] = jnp.concatenate(h_outs + c_outs,
                                         axis=-1).astype(state_out_ref.dtype)

    # --- Linear head + scaled update added to x -------------------------------
    # TODO(synk): newx is lane-sparse (Out=10); folding it into the slab store
    # only pays for larger Out, so it stays a separate (masked) store here.
    update = (jnp.dot(layer_in.astype(mxu_dtype), wlin_ref[...],
                      preferred_element_type=jnp.float32)
              + blin_ref[...]) * update_scale
    newx_ref[...] = (x_ref[...] + update).astype(newx_ref.dtype)


class LSTMBlackBoxOptimizeePallas:
    """JAX/Pallas port of LSTM_BlackBox_Optimizee_Model (forward only)."""

    def __init__(self, input_size, output_size, hidden_size, num_stacks,
                 batchsize, preprocess=True, p=10, output_scale=1, seed=0,
                 block_batch=None, mxu_dtype=jnp.float32,
                 state_dtype=jnp.float32):
        assert preprocess, "only the preprocess=True path is implemented"
        assert num_stacks >= 2, "weights are stacked assuming num_stacks >= 2"
        self.input_size = input_size
        self.output_size = output_size
        self.hidden_size = hidden_size
        self.num_stacks = num_stacks
        self.batchsize = batchsize
        self.p = float(p)
        self.output_scale = float(output_scale)
        self.mxu_dtype = mxu_dtype
        self.state_dtype = state_dtype

        H, L, In, Out = hidden_size, num_stacks, input_size, output_size
        B = batchsize
        S = 2 * L * H                      # packed state slab width (lane-dense)
        self._slab_width = S

        # ---- batch tile heuristic ---------------------------------------------
        # Measured sweet spot is ~512-2048 rows (per-grid-step overhead amortized,
        # ~85% of HBM roofline past 512); keep >= 2 grid blocks when B allows so
        # v7x's two TensorCores are both used; per-row VMEM stays well under the
        # 48 MiB budget (v7x physical VMEM is 64 MiB).
        if block_batch is None:
            tb_cap = min(2048, B // 2) if B >= 16 else B
            block_batch = next((tb for tb in (2048, 1024, 512, 256, 128, 64, 32,
                                              16, 8)
                                if tb <= tb_cap and B % tb == 0), B)
        assert B % block_batch == 0, "batchsize must be divisible by block_batch"
        self._tb = block_batch
        TB = block_batch
        grid = (B // TB,)

        # ---- explicit scoped-VMEM limit (v5e default is only 16 MiB) -----------
        st_bytes = jnp.dtype(state_dtype).itemsize
        mx_bytes = jnp.dtype(mxu_dtype).itemsize
        weight_bytes = mx_bytes * ((2 * In + H) * 4 * H
                                   + (L - 1) * 2 * H * 4 * H
                                   + (2 * In) * 4 * H
                                   + (L - 1) * H * 4 * H
                                   + H * Out) + 4 * (L * 4 * H + Out)
        io_row_bytes = 4 * In + 8 * Out + 2 * st_bytes * S       # dbl-buffered I/O
        interm_row_bytes = 4 * L * 8 * 4 * H                     # f32 temporaries
        vmem_est = 2 * weight_bytes + 2 * TB * io_row_bytes + TB * interm_row_bytes
        vmem_limit = int(min(48 * 2 ** 20, max(32 * 2 ** 20, int(1.5 * vmem_est))))

        # ---- parameters (PyTorch-style uniform(-1/sqrt(H), 1/sqrt(H))) ---------
        k = 1.0 / math.sqrt(H)
        key = jax.random.PRNGKey(seed)
        ks = jax.random.split(key, 8)
        uni = lambda kk, shape: jax.random.uniform(
            kk, shape, jnp.float32, minval=-k, maxval=k)

        w_ih0 = uni(ks[0], (2 * In, 4 * H))         # layer-0 input weight (K,4H)
        w_ih_rest = uni(ks[1], (L - 1, H, 4 * H))   # layers >= 1 input weights
        w_hh = uni(ks[2], (L, H, 4 * H))            # recurrent weights
        b_ih = uni(ks[3], (L, 4 * H))
        b_hh = uni(ks[4], (L, 4 * H))
        w_lin = uni(ks[5], (H, Out))
        b_lin = uni(ks[6], (1, Out))
        bias = b_ih + b_hh                          # PyTorch adds both biases

        # raw f32 copies for the pure-JAX reference
        self.ref_w_ih = [w_ih0] + [w_ih_rest[l] for l in range(L - 1)]
        self.ref_w_hh = w_hh
        self.ref_bias = bias
        self.ref_w_lin = w_lin
        self.ref_b_lin = b_lin

        # kernel weights: g-gate columns pre-scaled by 2 (tanh-via-sigmoid
        # identity) and layer input + recurrent weights stacked host-side so
        # each layer is a single MXU dot.
        prescale = lambda w: w.at[..., 2 * H:3 * H].multiply(2.0)
        w_ih0_s = prescale(w_ih0)
        w_ih_rest_s = prescale(w_ih_rest)
        w_hh_s = prescale(w_hh)
        self.bias_k = prescale(bias).reshape(L, 1, 4 * H)          # f32, post-MXU
        self.w_in0_z = w_ih0_s.astype(mxu_dtype)                   # (2In, 4H)
        self.w_rest_z = w_ih_rest_s.astype(mxu_dtype)              # (L-1, H, 4H)
        self.w_in0_r = jnp.concatenate(
            [w_ih0_s, w_hh_s[0]], axis=0).astype(mxu_dtype)        # (2In+H, 4H)
        self.w_rest_r = jnp.concatenate(
            [w_ih_rest_s, w_hh_s[1:]], axis=1).astype(mxu_dtype)   # (L-1, 2H, 4H)
        self.w_lin_k = w_lin.astype(mxu_dtype)
        self.b_lin_k = b_lin                                       # f32

        # ---- BlockSpecs ---------------------------------------------------------
        # TODO(synk): with very small TB, pipeline_mode=pl.Buffered(3) on the
        # row-tiled inputs would hide more DMA latency; omitted at TB >= 128-ish.
        row = lambda w: pl.BlockSpec((TB, w), lambda i: (i, 0))     # batch-tiled
        pin2 = lambda a, b: pl.BlockSpec((a, b), lambda i: (0, 0))  # resident
        pin3 = lambda a, b, c: pl.BlockSpec((a, b, c), lambda i: (0, 0, 0))

        w_specs_tail = [pin3(L, 1, 4 * H),        # bias
                        pin2(H, Out),             # w_lin
                        pin2(1, Out)]             # b_lin

        out_shape = (jax.ShapeDtypeStruct((B, Out), jnp.float32),   # new x
                     jax.ShapeDtypeStruct((B, S), state_dtype))     # packed (h,c)
        out_specs = (row(Out), row(S))
        cparams = pltpu.CompilerParams(
            dimension_semantics=("parallel",),   # TODO(synk): try CORE_PARALLEL on v7x
            vmem_limit_bytes=vmem_limit)

        common_kw = dict(num_stacks=L, hidden_size=H,
                         inv_p=1.0 / self.p, exp_p=math.exp(self.p),
                         update_scale=self.output_scale * 1e-5,
                         mxu_dtype=mxu_dtype)

        # variant 1: prev_state is None -> no h0/c0 input, no recurrent rows
        self._call_zero = pl.pallas_call(
            functools.partial(_optimizee_kernel, zero_state=True, **common_kw),
            grid=grid,
            in_specs=[row(In), row(Out),
                      pin2(2 * In, 4 * H), pin3(L - 1, H, 4 * H)] + w_specs_tail,
            out_specs=out_specs,
            out_shape=out_shape,
            compiler_params=cparams,
        )

        # variant 2: recurrent step; packed state input aliased to state output
        self._call_full = pl.pallas_call(
            functools.partial(_optimizee_kernel, zero_state=False, **common_kw),
            grid=grid,
            in_specs=[row(In), row(Out), row(S),
                      pin2(2 * In + H, 4 * H), pin3(L - 1, 2 * H, 4 * H)]
                     + w_specs_tail,
            out_specs=out_specs,
            out_shape=out_shape,
            input_output_aliases={2: 1},        # state_in -> state_out (in place)
            compiler_params=cparams,
        )

        self._weights_zero = (self.w_in0_z, self.w_rest_z,
                              self.bias_k, self.w_lin_k, self.b_lin_k)
        self._weights_full = (self.w_in0_r, self.w_rest_r,
                              self.bias_k, self.w_lin_k, self.b_lin_k)

    # ---- state <-> lane-dense slab plumbing (only when the caller needs it) ----
    def pack_state(self, state):
        h, c = state                                  # each (L, B, H)
        L, H = self.num_stacks, self.hidden_size
        B = h.shape[1]
        hp = jnp.transpose(jnp.asarray(h, jnp.float32), (1, 0, 2)).reshape(B, L * H)
        cp = jnp.transpose(jnp.asarray(c, jnp.float32), (1, 0, 2)).reshape(B, L * H)
        return jnp.concatenate([hp, cp], axis=-1).astype(self.state_dtype)

    def unpack_state(self, slab):
        L, H = self.num_stacks, self.hidden_size
        slab = slab.astype(jnp.float32)
        B = slab.shape[0]
        h = jnp.transpose(slab[:, :L * H].reshape(B, L, H), (1, 0, 2))
        c = jnp.transpose(slab[:, L * H:].reshape(B, L, H), (1, 0, 2))
        return h, c

    # ---- fast path: carry the packed (B, 2*L*H) slab across optimizer steps ----
    def step(self, x, input_gradients, packed_state=None):
        x = jnp.asarray(x, jnp.float32)
        g = jnp.asarray(input_gradients, jnp.float32)
        if packed_state is None:
            return self._call_zero(g, x, *self._weights_zero)
        packed_state = jnp.asarray(packed_state).astype(self.state_dtype)
        return self._call_full(g, x, packed_state, *self._weights_full)

    # ---- torch-compatible API: prev_state / next_state are (h, c) (L, B, H) ----
    def __call__(self, x, input_gradients, prev_state=None, i=0):
        slab_in = None if prev_state is None else self.pack_state(prev_state)
        new_x, slab = self.step(x, input_gradients, slab_in)
        return new_x, self.unpack_state(slab)


# ---------------------------------------------------------------------------
# pure-JAX reference (raw unfused / unprescaled weights, real tanh) for checks
def _reference(model, x, g, state=None):
    L, H = model.num_stacks, model.hidden_size
    p = model.p
    clamp_log = jnp.clip(jnp.log(jnp.abs(g)) / p, -1.0, 1.0)
    clamp_sign = jnp.clip(math.exp(p) * g, -1.0, 1.0)
    inp = jnp.concatenate([clamp_log, clamp_sign], axis=-1)
    if state is None:
        h0 = jnp.zeros((L, x.shape[0], H), jnp.float32)
        c0 = jnp.zeros_like(h0)
    else:
        h0, c0 = state
    hs, cs = [], []
    for l in range(L):
        gates = inp @ model.ref_w_ih[l] + h0[l] @ model.ref_w_hh[l] + model.ref_bias[l]
        i_g = jax.nn.sigmoid(gates[:, 0 * H:1 * H])
        f_g = jax.nn.sigmoid(gates[:, 1 * H:2 * H])
        g_g = jnp.tanh(gates[:, 2 * H:3 * H])
        o_g = jax.nn.sigmoid(gates[:, 3 * H:4 * H])
        c_new = f_g * c0[l] + i_g * g_g
        h_new = o_g * jnp.tanh(c_new)
        hs.append(h_new)
        cs.append(c_new)
        inp = h_new
    upd = (inp @ model.ref_w_lin + model.ref_b_lin) * (model.output_scale * 1e-5)
    return x + upd, jnp.stack(hs), jnp.stack(cs)


if __name__ == "__main__":
    # small, forward-consistent shapes; auto tile -> TB=32, grid=(2,) ("parallel")
    batchsize = 64
    input_size = 10       # dimensionality of the "optimizee" parameters
    output_size = 10      # update has same dimensionality as x
    hidden_size = 32
    num_stacks = 2

    model = LSTMBlackBoxOptimizeePallas(
        input_size, output_size, hidden_size, num_stacks, batchsize,
        preprocess=True, p=10, output_scale=1, seed=0,
        mxu_dtype=jnp.float32, state_dtype=jnp.float32)

    key = jax.random.PRNGKey(0)
    kx, kg = jax.random.split(key)
    x0 = jax.random.normal(kx, (batchsize, output_size), jnp.float32)
    grads = jax.random.normal(kg, (3, batchsize, input_size), jnp.float32) * 0.1

    # fast path: carry the packed (B, 2*L*H) state slab across optimizer steps
    xs, slab = x0, None
    for t in range(3):
        xs, slab = model.step(xs, grads[t], slab)
    h_fin, c_fin = model.unpack_state(slab)
    jax.block_until_ready((xs, h_fin, c_fin))

    # reference trajectory
    rx, rh, rc = x0, None, None
    for t in range(3):
        rx, rh, rc = _reference(model, rx, grads[t],
                                None if rh is None else (rh, rc))

    ok = (jnp.allclose(xs, rx, atol=1e-5, rtol=1e-5)
          and jnp.allclose(h_fin, rh, atol=1e-5, rtol=1e-5)
          and jnp.allclose(c_fin, rc, atol=1e-5, rtol=1e-5))

    # also exercise the torch-compatible (h, c) tuple API (both kernel variants)
    x1_t, state1_t = model(x0, grads[0], prev_state=None, i=0)
    x2_t, state2_t = model(x1_t, grads[1], prev_state=state1_t, i=1)
    jax.block_until_ready((x2_t, state2_t))
    rx1, rh1, rc1 = _reference(model, x0, grads[0], None)
    rx2, rh2, rc2 = _reference(model, rx1, grads[1], (rh1, rc1))
    ok = (ok
          and jnp.allclose(x2_t, rx2, atol=1e-5, rtol=1e-5)
          and jnp.allclose(state2_t[0], rh2, atol=1e-5, rtol=1e-5)
          and jnp.allclose(state2_t[1], rc2, atol=1e-5, rtol=1e-5))

    assert ok, "mismatch vs reference"
    print("KERNEL_OK")
</pallas_src>

<mosaic_0001>
module attributes {stable_mosaic.version = 11 : i64} {
  func.func @_optimizee_kernel(%arg0: i32, %arg1: memref<32x10xf32, #tpu.memory_space<vmem>>, %arg2: memref<32x10xf32, #tpu.memory_space<vmem>>, %arg3: memref<20x128xf32, #tpu.memory_space<vmem>>, %arg4: memref<1x32x128xf32, #tpu.memory_space<vmem>>, %arg5: memref<2x1x128xf32, #tpu.memory_space<vmem>>, %arg6: memref<32x10xf32, #tpu.memory_space<vmem>>, %arg7: memref<1x10xf32, #tpu.memory_space<vmem>>, %arg8: memref<32x10xf32, #tpu.memory_space<vmem>>, %arg9: memref<32x128xf32, #tpu.memory_space<vmem>>) attributes {dimension_semantics = [#tpu.dimension_semantics<parallel>], iteration_bounds = array<i64: 2>, scalar_prefetch = 0 : i64, scratch_operands = 0 : i64, tpu.core_type = #tpu.core_type<tc>, window_params = [{transform_indices = @transform_0, window_bounds = array<i64: 32, 10>}, {transform_indices = @transform_1, window_bounds = array<i64: 32, 10>}, {pipeline_mode = #tpu.pipeline_mode<synchronous>, transform_indices = @transform_2, window_bounds = array<i64: 20, 128>}, {pipeline_mode = #tpu.pipeline_mode<synchronous>, transform_indices = @transform_3, window_bounds = array<i64: 1, 32, 128>}, {pipeline_mode = #tpu.pipeline_mode<synchronous>, transform_indices = @transform_4, window_bounds = array<i64: 2, 1, 128>}, {pipeline_mode = #tpu.pipeline_mode<synchronous>, transform_indices = @transform_5, window_bounds = array<i64: 32, 10>}, {pipeline_mode = #tpu.pipeline_mode<synchronous>, transform_indices = @transform_6, window_bounds = array<i64: 1, 10>}, {transform_indices = @transform_7, window_bounds = array<i64: 32, 10>}, {transform_indices = @transform_8, window_bounds = array<i64: 32, 128>}]} {
    %c0 = arith.constant 0 : index
    %c0_0 = arith.constant 0 : index
    %0 = vector.load %arg1[%c0, %c0_0] : memref<32x10xf32, #tpu.memory_space<vmem>>, vector<32x10xf32>
    %1 = math.absf %0 : vector<32x10xf32>
    %2 = math.log %1 : vector<32x10xf32>
    %cst = arith.constant 1.000000e-01 : f32
    %3 = vector.broadcast %cst : f32 to vector<32x10xf32>
    %4 = arith.mulf %2, %3 : vector<32x10xf32>
    %cst_1 = arith.constant -1.000000e+00 : f32
    %cst_2 = arith.constant 1.000000e+00 : f32
    %5 = vector.broadcast %cst_1 : f32 to vector<32x10xf32>
    %6 = arith.maximumf %5, %4 : vector<32x10xf32>
    %7 = vector.broadcast %cst_2 : f32 to vector<32x10xf32>
    %8 = arith.minimumf %7, %6 : vector<32x10xf32>
    %cst_3 = arith.constant 22026.4648 : f32
    %9 = vector.broadcast %cst_3 : f32 to vector<32x10xf32>
    %10 = arith.mulf %9, %0 : vector<32x10xf32>
    %cst_4 = arith.constant -1.000000e+00 : f32
    %cst_5 = arith.constant 1.000000e+00 : f32
    %11 = vector.broadcast %cst_4 : f32 to vector<32x10xf32>
    %12 = arith.maximumf %11, %10 : vector<32x10xf32>
    %13 = vector.broadcast %cst_5 : f32 to vector<32x10xf32>
    %14 = arith.minimumf %13, %12 : vector<32x10xf32>
    %c0_6 = arith.constant 0 : index
    %c0_7 = arith.constant 0 : index
    %15 = vector.load %arg3[%c0_6, %c0_7] : memref<20x128xf32, #tpu.memory_space<vmem>>, vector<20x128xf32>
    %16 = tpu.concatenate %8, %14 in 1 : vector<32x10xf32>, vector<32x10xf32> -> vector<32x20xf32>
    %cst_8 = arith.constant dense<0.000000e+00> : vector<32x128xf32>
    %17 = tpu.matmul %16, %15, %cst_8 {dimension_numbers = #tpu.dot_dimension_numbers<[1], [0], [0], [1], [0, 0, 1, 1], [], []>} : vector<32x20xf32>, vector<20x128xf32>, vector<32x128xf32> -> vector<32x128xf32>
    %c0_9 = arith.constant 0 : index
    %c0_10 = arith.constant 0 : index
    %c0_11 = arith.constant 0 : index
    %18 = vector.load %arg5[%c0_9, %c0_10, %c0_11] : memref<2x1x128xf32, #tpu.memory_space<vmem>>, vector<1x1x128xf32>
    %19 = vector.shape_cast %18 : vector<1x1x128xf32> to vector<1x128xf32>
    %20 = vector.broadcast %19 : vector<1x128xf32> to vector<32x128xf32>
    %21 = arith.addf %17, %20 : vector<32x128xf32>
    %22 = arith.negf %21 : vector<32x128xf32>
    %23 = math.exp %22 : vector<32x128xf32>
    %cst_12 = arith.constant 1.000000e+00 : f32
    %24 = vector.broadcast %cst_12 : f32 to vector<32x128xf32>
    %25 = arith.addf %24, %23 : vector<32x128xf32>
    %26 = arith.divf %24, %25 : vector<32x128xf32>
    %27 = vector.extract_strided_slice %26 {offsets = [0, 0], sizes = [32, 32], strides = [1, 1]} : vector<32x128xf32> to vector<32x32xf32>
    %28 = vector.extract_strided_slice %26 {offsets = [0, 64], sizes = [32, 32], strides = [1, 1]} : vector<32x128xf32> to vector<32x32xf32>
    %cst_13 = arith.constant 2.000000e+00 : f32
    %29 = vector.broadcast %cst_13 : f32 to vector<32x32xf32>
    %30 = arith.mulf %29, %28 : vector<32x32xf32>
    %cst_14 = arith.constant 1.000000e+00 : f32
    %31 = vector.broadcast %cst_14 : f32 to vector<32x32xf32>
    %32 = arith.subf %30, %31 : vector<32x32xf32>
    %33 = vector.extract_strided_slice %26 {offsets = [0, 96], sizes = [32, 32], strides = [1, 1]} : vector<32x128xf32> to vector<32x32xf32>
    %34 = arith.mulf %27, %32 : vector<32x32xf32>
    %35 = math.tanh %34 : vector<32x32xf32>
    %36 = arith.mulf %33, %35 : vector<32x32xf32>
    %c0_15 = arith.constant 0 : index
    %c0_16 = arith.constant 0 : index
    %c0_17 = arith.constant 0 : index
    %37 = vector.load %arg4[%c0_15, %c0_16, %c0_17] : memref<1x32x128xf32, #tpu.memory_space<vmem>>, vector<1x32x128xf32>
    %38 = vector.shape_cast %37 : vector<1x32x128xf32> to vector<32x128xf32>
    %cst_18 = arith.constant dense<0.000000e+00> : vector<32x128xf32>
    %39 = tpu.matmul %36, %38, %cst_18 {dimension_numbers = #tpu.dot_dimension_numbers<[1], [0], [0], [1], [0, 0, 1, 1], [], []>} : vector<32x32xf32>, vector<32x128xf32>, vector<32x128xf32> -> vector<32x128xf32>
    %c1 = arith.constant 1 : index
    %c0_19 = arith.constant 0 : index
    %c0_20 = arith.constant 0 : index
    %40 = vector.load %arg5[%c1, %c0_19, %c0_20] : memref<2x1x128xf32, #tpu.memory_space<vmem>>, vector<1x1x128xf32>
    %41 = vector.shape_cast %40 : vector<1x1x128xf32> to vector<1x128xf32>
    %42 = vector.broadcast %41 : vector<1x128xf32> to vector<32x128xf32>
    %43 = arith.addf %39, %42 : vector<32x128xf32>
    %44 = arith.negf %43 : vector<32x128xf32>
    %45 = math.exp %44 : vector<32x128xf32>
    %cst_21 = arith.constant 1.000000e+00 : f32
    %46 = vector.broadcast %cst_21 : f32 to vector<32x128xf32>
    %47 = arith.addf %46, %45 : vector<32x128xf32>
    %48 = arith.divf %46, %47 : vector<32x128xf32>
    %49 = vector.extract_strided_slice %48 {offsets = [0, 0], sizes = [32, 32], strides = [1, 1]} : vector<32x128xf32> to vector<32x32xf32>
    %50 = vector.extract_strided_slice %48 {offsets = [0, 64], sizes = [32, 32], strides = [1, 1]} : vector<32x128xf32> to vector<32x32xf32>
    %cst_22 = arith.constant 2.000000e+00 : f32
    %51 = vector.broadcast %cst_22 : f32 to vector<32x32xf32>
    %52 = arith.mulf %51, %50 : vector<32x32xf32>
    %cst_23 = arith.constant 1.000000e+00 : f32
    %53 = vector.broadcast %cst_23 : f32 to vector<32x32xf32>
    %54 = arith.subf %52, %53 : vector<32x32xf32>
    %55 = vector.extract_strided_slice %48 {offsets = [0, 96], sizes = [32, 32], strides = [1, 1]} : vector<32x128xf32> to vector<32x32xf32>
    %56 = arith.mulf %49, %54 : vector<32x32xf32>
    %57 = math.tanh %56 : vector<32x32xf32>
    %58 = arith.mulf %55, %57 : vector<32x32xf32>
    %59 = tpu.concatenate %36, %58, %34, %56 in 1 : vector<32x32xf32>, vector<32x32xf32>, vector<32x32xf32>, vector<32x32xf32> -> vector<32x128xf32>
    %c0_24 = arith.constant 0 : index
    %c0_25 = arith.constant 0 : index
    %60 = vector.load %arg9[%c0_24, %c0_25] : memref<32x128xf32, #tpu.memory_space<vmem>>, vector<32x128xf32>
    tpu.vector_store %arg9[%c0_24, %c0_25], %59 {strides = array<i32>} : memref<32x128xf32, #tpu.memory_space<vmem>>, vector<32x128xf32>,
    %c0_26 = arith.constant 0 : index
    %c0_27 = arith.constant 0 : index
    %61 = vector.load %arg6[%c0_26, %c0_27] : memref<32x10xf32, #tpu.memory_space<vmem>>, vector<32x10xf32>
    %cst_28 = arith.constant dense<0.000000e+00> : vector<32x10xf32>
    %62 = tpu.matmul %58, %61, %cst_28 {dimension_numbers = #tpu.dot_dimension_numbers<[1], [0], [0], [1], [0, 0, 1, 1], [], []>} : vector<32x32xf32>, vector<32x10xf32>, vector<32x10xf32> -> vector<32x10xf32>
    %c0_29 = arith.constant 0 : index
    %c0_30 = arith.constant 0 : index
    %63 = vector.load %arg7[%c0_29, %c0_30] : memref<1x10xf32, #tpu.memory_space<vmem>>, vector<1x10xf32>
    %64 = vector.broadcast %63 : vector<1x10xf32> to vector<32x10xf32>
    %65 = arith.addf %62, %64 : vector<32x10xf32>
    %cst_31 = arith.constant 9.99999974E-6 : f32
    %66 = vector.broadcast %cst_31 : f32 to vector<32x10xf32>
    %67 = arith.mulf %65, %66 : vector<32x10xf32>
    %c0_32 = arith.constant 0 : index
    %c0_33 = arith.constant 0 : index
    %68 = vector.load %arg2[%c0_32, %c0_33] : memref<32x10xf32, #tpu.memory_space<vmem>>, vector<32x10xf32>
    %69 = arith.addf %68, %67 : vector<32x10xf32>
    %c0_34 = arith.constant 0 : index
    %c0_35 = arith.constant 0 : index
    %70 = vector.load %arg8[%c0_34, %c0_35] : memref<32x10xf32, #tpu.memory_space<vmem>>, vector<32x10xf32>
    tpu.vector_store %arg8[%c0_34, %c0_35], %69 {strides = array<i32>} : memref<32x10xf32, #tpu.memory_space<vmem>>, vector<32x10xf32>,
    return
  }
  func.func @transform_0(%arg0: i32) -> (i32, i32) {
    %c0_i32 = arith.constant 0 : i32
    %c0_i32_0 = arith.constant 0 : i32
    return %arg0, %c0_i32 : i32, i32
  }
  func.func @transform_1(%arg0: i32) -> (i32, i32) {
    %c0_i32 = arith.constant 0 : i32
    %c0_i32_0 = arith.constant 0 : i32
    return %arg0, %c0_i32 : i32, i32
  }
  func.func @transform_2(%arg0: i32) -> (i32, i32) {
    %c0_i32 = arith.constant 0 : i32
    %c0_i32_0 = arith.constant 0 : i32
    %c0_i32_1 = arith.constant 0 : i32
    return %c0_i32, %c0_i32_0 : i32, i32
  }
  func.func @transform_3(%arg0: i32) -> (i32, i32, i32) {
    %c0_i32 = arith.constant 0 : i32
    %c0_i32_0 = arith.constant 0 : i32
    %c0_i32_1 = arith.constant 0 : i32
    %c0_i32_2 = arith.constant 0 : i32
    return %c0_i32, %c0_i32_0, %c0_i32_1 : i32, i32, i32
  }
  func.func @transform_4(%arg0: i32) -> (i32, i32, i32) {
    %c0_i32 = arith.constant 0 : i32
    %c0_i32_0 = arith.constant 0 : i32
    %c0_i32_1 = arith.constant 0 : i32
    %c0_i32_2 = arith.constant 0 : i32
    return %c0_i32, %c0_i32_0, %c0_i32_1 : i32, i32, i32
  }
  func.func @transform_5(%arg0: i32) -> (i32, i32) {
    %c0_i32 = arith.constant 0 : i32
    %c0_i32_0 = arith.constant 0 : i32
    %c0_i32_1 = arith.constant 0 : i32
    return %c0_i32, %c0_i32_0 : i32, i32
  }
  func.func @transform_6(%arg0: i32) -> (i32, i32) {
    %c0_i32 = arith.constant 0 : i32
    %c0_i32_0 = arith.constant 0 : i32
    %c0_i32_1 = arith.constant 0 : i32
    return %c0_i32, %c0_i32_0 : i32, i32
  }
  func.func @transform_7(%arg0: i32) -> (i32, i32) {
    %c0_i32 = arith.constant 0 : i32
    %c0_i32_0 = arith.constant 0 : i32
    return %arg0, %c0_i32 : i32, i32
  }
  func.func @transform_8(%arg0: i32) -> (i32, i32) {
    %c0_i32 = arith.constant 0 : i32
    %c0_i32_0 = arith.constant 0 : i32
    return %arg0, %c0_i32 : i32, i32
  }
}

</mosaic_0001>

<llo_original>
// kernel: tpu_custom_call.1
$region0: #{tpu_custom_call.1}
  #allocation0 [shape = 'u32[]', space=smem, size = 0x4, offset = 0x4, fixed_abs, tag = 'smem constant byte address 0x4 - core index']
  #allocation1 [shape = 'u32[144,128]{1,0:T(1,128)}', space=vmem, size = 0x12000, scoped, tag = 'internal scratch']
  %s0 = inlined_call_operand.vmem [shape: f32[64,10], index: 0, kind: input, shape index: {}]
  %s1 = inlined_call_operand.vmem [shape: f32[64,10], index: 1, kind: input, shape index: {}]
  %s2 = inlined_call_operand.vmem [shape: f32[20,128], index: 2, kind: input, shape index: {}]
  %s3 = inlined_call_operand.vmem [shape: f32[1,32,128], index: 3, kind: input, shape index: {}]
  %s4 = inlined_call_operand.vmem [shape: f32[2,1,128], index: 4, kind: input, shape index: {}]
  %s5 = inlined_call_operand.vmem [shape: f32[32,10], index: 5, kind: input, shape index: {}]
  %s6 = inlined_call_operand.vmem [shape: f32[1,10], index: 6, kind: input, shape index: {}]
  %s7 = inlined_call_operand.vmem [shape: f32[64,10], index: 7, kind: output, shape index: {0}]
  %s8 = inlined_call_operand.hbm [shape: f32[64,128], index: 8, kind: output, shape index: {1}]
  %9 = xla_tuple %s7, %s8
  %s10 = sld [smem:[#allocation0]]
  $region69: #{tpu_custom_call.1} parent=0
    _
  %s12 = ssub.s32 1, %s10
  %s13 = scalar_select 0, %s12, %s10
  $region1: #{tpu_custom_call.1} parent=0
    #allocation2 [shape = 'u8[32768]{0}', space=vmem, size = 0x8000, scoped, tag = 'output window, operand 1']
    #allocation3 [shape = 's32[2]{0}', space=sflag, size = 0x8, scoped, tag = 'scoped memory for tpu_custom_call.1']
    %14 = vsyncpa [#allocation3], 0
    %s15 = scalar_lea.sflag [#allocation3], 1
    %16 = vsyncpa %s15, 0
    loop: start=0, step=1, limit=4
    $region2: #{tpu_custom_call.1} parent=1 // loop_pre_header
      _
    $region3: #{tpu_custom_call.1} parent=1 // loop_header
      %s18 = sphi 0, %s22
      %p19 = scmp.ge.s32.totalorder %s18, 4
      %s28 = sphi 0, %s30
      %s31 = sphi 0, %s28
      %s32 = sphi 0, %s31
      %s48 = sphi 0, %s32
      %s54 = sphi 0, %s56
      %s57 = sphi 0, %s54
      %s58 = sphi 0, %s57
      %s74 = sphi 0, %s58
      %s78 = sphi 0, %s78
      %s80 = sphi 0, %s78
      %s81 = sphi 0, %s80
      %s95 = sphi 0, %s81
      %s99 = sphi 0, %s99
      %s101 = sphi 0, %s99
      %s102 = sphi 0, %s101
      %s116 = sphi 0, %s102
      %s120 = sphi 0, %s120
      %s122 = sphi 0, %s120
      %s123 = sphi 0, %s122
      %s137 = sphi 0, %s123
      %s141 = sphi 0, %s141
      %s143 = sphi 0, %s141
      %s144 = sphi 0, %s143
      %s158 = sphi 0, %s144
      %s162 = sphi 0, %s162
      %s164 = sphi 0, %s162
      %s165 = sphi 0, %s164
      %s179 = sphi 0, %s165
      %s185 = sphi 0, %s187
      %s188 = sphi 0, %s185
      %s189 = sphi 0, %s188
      %s205 = sphi 0, %s189
      %s211 = sphi 0, %s213
      %s214 = sphi 0, %s211
      %s215 = sphi 0, %s214
      %s231 = sphi 0, %s215
    $region4: #{tpu_custom_call.1} parent=1 // loop_header_branch
      %21 = sbr.rel (%p19) target = $region8
    $region5: #{tpu_custom_call.1} parent=1 // loop_body
      %s23 = ssub.s32 %s18, 1
      %s24 = ssub.s32 %s18, 2
      %s25 = sadd.s32 %s18, 1
      %s26 = ssub.s32 %s18, %s25
      %p27 = scmp.eq.s32.totalorder %s26, 0
      %s29 = sadd.s32 %s28, 1
      %s30 = scalar_select %p27, %s28, %s29
      %p33 = pneg %p27
      %p34 = scmp.eq.s32.totalorder %s18, 1
      %p35 = por %p33, %p34
      %p36 = scmp.ne.s32.totalorder %s28, %s31
      %p37 = scmp.eq.s32.totalorder %s18, 0
      %p38 = por %p36, %p37
      %p39 = scmp.ne.s32.totalorder %s28, %s31
      %p40 = scmp.eq.s32.totalorder %s23, 1
      %p41 = por %p39, %p40
      %p42 = scmp.ne.s32.totalorder %s31, %s32
      %p43 = scmp.eq.s32.totalorder %s23, 0
      %p44 = por %p42, %p43
      %p45 = scmp.ne.s32.totalorder %s31, %s32
      %p46 = scmp.eq.s32.totalorder %s24, 1
      %p47 = por %p45, %p46
      %p49 = scmp.ne.s32.totalorder %s32, %s48
      %p50 = scmp.eq.s32.totalorder %s24, 0
      %p51 = por %p49, %p50
      %s52 = ssub.s32 %s18, %s25
      %p53 = scmp.eq.s32.totalorder %s52, 0
      %s55 = sadd.s32 %s54, 1
      %s56 = scalar_select %p53, %s54, %s55
      %p59 = pneg %p53
      %p60 = scmp.eq.s32.totalorder %s18, 1
      %p61 = por %p59, %p60
      %p62 = scmp.ne.s32.totalorder %s54, %s57
      %p63 = scmp.eq.s32.totalorder %s18, 0
      %p64 = por %p62, %p63
      %p65 = scmp.ne.s32.totalorder %s54, %s57
      %p66 = scmp.eq.s32.totalorder %s23, 1
      %p67 = por %p65, %p66
      %p68 = scmp.ne.s32.totalorder %s57, %s58
      %p69 = scmp.eq.s32.totalorder %s23, 0
      %p70 = por %p68, %p69
      %p71 = scmp.ne.s32.totalorder %s57, %s58
      %p72 = scmp.eq.s32.totalorder %s24, 1
      %p73 = por %p71, %p72
      %p75 = scmp.ne.s32.totalorder %s58, %s74
      %p76 = scmp.eq.s32.totalorder %s24, 0
      %p77 = por %p75, %p76
      %s79 = sadd.s32 %s78, 1
      %p82 = scmp.eq.s32.totalorder %s18, 1
      %p83 = scmp.ne.s32.totalorder %s78, %s80
      %p84 = scmp.eq.s32.totalorder %s18, 0
      %p85 = por %p83, %p84
      %p86 = scmp.ne.s32.totalorder %s78, %s80
      %p87 = scmp.eq.s32.totalorder %s23, 1
      %p88 = por %p86, %p87
      %p89 = scmp.ne.s32.totalorder %s80, %s81
      %p90 = scmp.eq.s32.totalorder %s23, 0
      %p91 = por %p89, %p90
      %p92 = scmp.ne.s32.totalorder %s80, %s81
      %p93 = scmp.eq.s32.totalorder %s24, 1
      %p94 = por %p92, %p93
      %p96 = scmp.ne.s32.totalorder %s81, %s95
      %p97 = scmp.eq.s32.totalorder %s24, 0
      %p98 = por %p96, %p97
      %s100 = sadd.s32 %s99, 1
      %p103 = scmp.eq.s32.totalorder %s18, 1
      %p104 = scmp.ne.s32.totalorder %s99, %s101
      %p105 = scmp.eq.s32.totalorder %s18, 0
      %p106 = por %p104, %p105
      %p107 = scmp.ne.s32.totalorder %s99, %s101
      %p108 = scmp.eq.s32.totalorder %s23, 1
      %p109 = por %p107, %p108
      %p110 = scmp.ne.s32.totalorder %s101, %s102
      %p111 = scmp.eq.s32.totalorder %s23, 0
      %p112 = por %p110, %p111
      %p113 = scmp.ne.s32.totalorder %s101, %s102
      %p114 = scmp.eq.s32.totalorder %s24, 1
      %p115 = por %p113, %p114
      %p117 = scmp.ne.s32.totalorder %s102, %s116
      %p118 = scmp.eq.s32.totalorder %s24, 0
      %p119 = por %p117, %p118
      %s121 = sadd.s32 %s120, 1
      %p124 = scmp.eq.s32.totalorder %s18, 1
      %p125 = scmp.ne.s32.totalorder %s120, %s122
      %p126 = scmp.eq.s32.totalorder %s18, 0
      %p127 = por %p125, %p126
      %p128 = scmp.ne.s32.totalorder %s120, %s122
      %p129 = scmp.eq.s32.totalorder %s23, 1
      %p130 = por %p128, %p129
      %p131 = scmp.ne.s32.totalorder %s122, %s123
      %p132 = scmp.eq.s32.totalorder %s23, 0
      %p133 = por %p131, %p132
      %p134 = scmp.ne.s32.totalorder %s122, %s123
      %p135 = scmp.eq.s32.totalorder %s24, 1
      %p136 = por %p134, %p135
      %p138 = scmp.ne.s32.totalorder %s123, %s137
      %p139 = scmp.eq.s32.totalorder %s24, 0
      %p140 = por %p138, %p139
      %s142 = sadd.s32 %s141, 1
      %p145 = scmp.eq.s32.totalorder %s18, 1
      %p146 = scmp.ne.s32.totalorder %s141, %s143
      %p147 = scmp.eq.s32.totalorder %s18, 0
      %p148 = por %p146, %p147
      %p149 = scmp.ne.s32.totalorder %s141, %s143
      %p150 = scmp.eq.s32.totalorder %s23, 1
      %p151 = por %p149, %p150
      %p152 = scmp.ne.s32.totalorder %s143, %s144
      %p153 = scmp.eq.s32.totalorder %s23, 0
      %p154 = por %p152, %p153
      %p155 = scmp.ne.s32.totalorder %s143, %s144
      %p156 = scmp.eq.s32.totalorder %s24, 1
      %p157 = por %p155, %p156
      %p159 = scmp.ne.s32.totalorder %s144, %s158
      %p160 = scmp.eq.s32.totalorder %s24, 0
      %p161 = por %p159, %p160
      %s163 = sadd.s32 %s162, 1
      %p166 = scmp.eq.s32.totalorder %s18, 1
      %p167 = scmp.ne.s32.totalorder %s162, %s164
      %p168 = scmp.eq.s32.totalorder %s18, 0
      %p169 = por %p167, %p168
      %p170 = scmp.ne.s32.totalorder %s162, %s164
      %p171 = scmp.eq.s32.totalorder %s23, 1
      %p172 = por %p170, %p171
      %p173 = scmp.ne.s32.totalorder %s164, %s165
      %p174 = scmp.eq.s32.totalorder %s23, 0
      %p175 = por %p173, %p174
      %p176 = scmp.ne.s32.totalorder %s164, %s165
      %p177 = scmp.eq.s32.totalorder %s24, 1
      %p178 = por %p176, %p177
      %p180 = scmp.ne.s32.totalorder %s165, %s179
      %p181 = scmp.eq.s32.totalorder %s24, 0
      %p182 = por %p180, %p181
      %s183 = ssub.s32 %s18, %s25
      %p184 = scmp.eq.s32.totalorder %s183, 0
      %s186 = sadd.s32 %s185, 1
      %s187 = scalar_select %p184, %s185, %s186
      %p190 = pneg %p184
      %p191 = scmp.eq.s32.totalorder %s18, 1
      %p192 = por %p190, %p191
      %p193 = scmp.ne.s32.totalorder %s185, %s188
      %p194 = scmp.eq.s32.totalorder %s18, 0
      %p195 = por %p193, %p194
      %p196 = scmp.ne.s32.totalorder %s185, %s188
      %p197 = scmp.eq.s32.totalorder %s23, 1
      %p198 = por %p196, %p197
      %p199 = scmp.ne.s32.totalorder %s188, %s189
      %p200 = scmp.eq.s32.totalorder %s23, 0
      %p201 = por %p199, %p200
      %p202 = scmp.ne.s32.totalorder %s188, %s189
      %p203 = scmp.eq.s32.totalorder %s24, 1
      %p204 = por %p202, %p203
      %p206 = scmp.ne.s32.totalorder %s189, %s205
      %p207 = scmp.eq.s32.totalorder %s24, 0
      %p208 = por %p206, %p207
      %s209 = ssub.s32 %s18, %s25
      %p210 = scmp.eq.s32.totalorder %s209, 0
      %s212 = sadd.s32 %s211, 1
      %s213 = scalar_select %p210, %s211, %s212
      %p216 = pneg %p210
      %p217 = scmp.eq.s32.totalorder %s18, 1
      %p218 = por %p216, %p217
      %p219 = scmp.ne.s32.totalorder %s211, %s214
      %p220 = scmp.eq.s32.totalorder %s18, 0
      %p221 = por %p219, %p220
      %p222 = scmp.ne.s32.totalorder %s211, %s214
      %p223 = scmp.eq.s32.totalorder %s23, 1
      %p224 = por %p222, %p223
      %p225 = scmp.ne.s32.totalorder %s214, %s215
      %p226 = scmp.eq.s32.totalorder %s23, 0
      %p227 = por %p225, %p226
      %p228 = scmp.ne.s32.totalorder %s214, %s215
      %p229 = scmp.eq.s32.totalorder %s24, 1
      %p230 = por %p228, %p229
      %p232 = scmp.ne.s32.totalorder %s215, %s231
      %p233 = scmp.eq.s32.totalorder %s24, 0
      %p234 = por %p232, %p233
      %p235 = scmp.le.s32.totalorder 1, %s18
      %p236 = scmp.lt.s32.totalorder %s18, 3
      %p237 = pnand %p235, %p236
      %p238 = pneg %p237
      // Predicated region
      $region9: #{tpu_custom_call.1} parent=5 // pred_check
        _
      $region10: #{tpu_custom_call.1} parent=5 // pred_check_branch
        %240 = sbr.rel (%p237) target = $region12
      $region11: #{tpu_custom_call.1} parent=5 // pred_region
        %s241 = ssub.s32 %s18, 1
        // Predicated region
        $region13: #{tpu_custom_call.1} parent=11 // pred_check
          %p242 = pneg %p91
        $region14: #{tpu_custom_call.1} parent=11 // pred_check_branch
          %244 = sbr.rel (%p242) target = $region16
        $region15: #{tpu_custom_call.1} parent=11 // pred_region
          _
        $region16: #{tpu_custom_call.1} parent=11 // pred_fallthru
          _
        // Predicated region
        $region17: #{tpu_custom_call.1} parent=11 // pred_check
          %p245 = pneg %p112
        $region18: #{tpu_custom_call.1} parent=11 // pred_check_branch
          %247 = sbr.rel (%p245) target = $region20
        $region19: #{tpu_custom_call.1} parent=11 // pred_region
          _
        $region20: #{tpu_custom_call.1} parent=11 // pred_fallthru
          _
        // Predicated region
        $region21: #{tpu_custom_call.1} parent=11 // pred_check
          %p248 = pneg %p133
        $region22: #{tpu_custom_call.1} parent=11 // pred_check_branch
          %250 = sbr.rel (%p248) target = $region24
        $region23: #{tpu_custom_call.1} parent=11 // pred_region
          _
        $region24: #{tpu_custom_call.1} parent=11 // pred_fallthru
          _
        // Predicated region
        $region25: #{tpu_custom_call.1} parent=11 // pred_check
          %p251 = pneg %p154
        $region26: #{tpu_custom_call.1} parent=11 // pred_check_branch
          %253 = sbr.rel (%p251) target = $region28
        $region27: #{tpu_custom_call.1} parent=11 // pred_region
          _
        $region28: #{tpu_custom_call.1} parent=11 // pred_fallthru
          _
        // Predicated region
        $region29: #{tpu_custom_call.1} parent=11 // pred_check
          %p254 = pneg %p175
        $region30: #{tpu_custom_call.1} parent=11 // pred_check_branch
          %256 = sbr.rel (%p254) target = $region32
        $region31: #{tpu_custom_call.1} parent=11 // pred_region
          _
        $region32: #{tpu_custom_call.1} parent=11 // pred_fallthru
          _
      $region12: #{tpu_custom_call.1} parent=5 // pred_fallthru
        _
      %p257 = scmp.lt.s32.totalorder %s18, 2
      // Predicated region
      $region33: #{tpu_custom_call.1} parent=5 // pred_check
        %p258 = pneg %p257
      $region34: #{tpu_custom_call.1} parent=5 // pred_check_branch
        %260 = sbr.rel (%p258) target = $region36
      $region35: #{tpu_custom_call.1} parent=5 // pred_region
        // Predicated region
        $region37: #{tpu_custom_call.1} parent=35 // pred_check
          %p261 = pneg %p38
        $region38: #{tpu_custom_call.1} parent=35 // pred_check_branch
          %263 = sbr.rel (%p261) target = $region40
        $region39: #{tpu_custom_call.1} parent=35 // pred_region
          %s264 = smul.u32 4, %s18
          %p265 = scmp.lt.s32.totalorder %s264, 7
          %s266 = scalar_select %p265, %s264, 7
          %s267 = smul.addr %s266, 8
          %s268 = scalar_lea.vmem %s0, %s267
          %s269 = smul.u32 4, %s18
        $region40: #{tpu_custom_call.1} parent=35 // pred_fallthru
          _
        // Predicated region
        $region41: #{tpu_custom_call.1} parent=35 // pred_check
          %p270 = pneg %p64
        $region42: #{tpu_custom_call.1} parent=35 // pred_check_branch
          %272 = sbr.rel (%p270) target = $region44
        $region43: #{tpu_custom_call.1} parent=35 // pred_region
          %s273 = smul.u32 4, %s18
          %p274 = scmp.lt.s32.totalorder %s273, 7
          %s275 = scalar_select %p274, %s273, 7
          %s276 = smul.addr %s275, 8
          %s277 = scalar_lea.vmem %s1, %s276
          %s278 = smul.u32 4, %s18
        $region44: #{tpu_custom_call.1} parent=35 // pred_fallthru
          _
      $region36: #{tpu_custom_call.1} parent=5 // pred_fallthru
        _
      %p279 = scmp.le.s32.totalorder 1, %s18
      %p280 = scmp.lt.s32.totalorder %s18, 3
      %p281 = pnand %p279, %p280
      %p282 = pneg %p281
      // Predicated region
      $region45: #{tpu_custom_call.1} parent=5 // pred_check
        _
      $region46: #{tpu_custom_call.1} parent=5 // pred_check_branch
        %284 = sbr.rel (%p281) target = $region48
      $region47: #{tpu_custom_call.1} parent=5 // pred_region
        %s285 = ssub.s32 %s18, 1
        %s286 = smul.u32 4, %s23
        %p287 = scmp.lt.s32.totalorder %s286, 7
        %s288 = scalar_select %p287, %s286, 7
        %s289 = smul.addr %s288, 8
        %s290 = scalar_lea.vmem %s0, %s289
        %p291 = pneg %p44
        %p292 = pneg %p41
        %s293 = smul.u32 4, %s23
        %p294 = scmp.lt.s32.totalorder %s293, 7
        %s295 = scalar_select %p294, %s293, 7
        %s296 = smul.addr %s295, 8
        %s297 = scalar_lea.vmem %s1, %s296
        %p298 = pneg %p70
        %p299 = pneg %p67
        %p300 = pneg %p91
        %p301 = pneg %p88
        %p302 = pneg %p112
        %p303 = pneg %p109
        %p304 = pneg %p133
        %p305 = pneg %p130
        %p306 = pneg %p154
        %p307 = pneg %p151
        %p308 = pneg %p175
        %p309 = pneg %p172
        %p310 = pneg %p201
        %p311 = pneg %p198
        %s312 = smul.u32 4, %s23
        %p313 = scmp.lt.s32.totalorder %s312, 7
        %s314 = scalar_select %p313, %s312, 7
        %s315 = smul.addr %s314, 8
        %s316 = scalar_lea.vmem %s7, %s315
        %p317 = pneg %p227
        %p318 = pneg %p224
        %s319 = sand.u32 %s214, 1
        %s320 = scalar_lea.sflag [#allocation3], %s319
        %s321 = sand.u32 %s214, 1
        %s322 = smul.addr %s321, 32
        %s323 = scalar_lea.vmem [#allocation2], %s322
        %s324 = smul.u32 4, %s23
        %p325 = scmp.lt.s32.totalorder %s324, 7
        %s326 = scalar_select %p325, %s324, 7
        %s327 = smul.addr %s326, 8
        %s328 = scalar_lea.vmem %s0, %s327
        %s329 = smul.u32 4, %s23
        %s330 = smul.u32 4, %s23
        %p331 = scmp.lt.s32.totalorder %s330, 7
        %s332 = scalar_select %p331, %s330, 7
        %s333 = smul.addr %s332, 8
        %s334 = scalar_lea.vmem %s1, %s333
        %s335 = smul.u32 4, %s23
        %s336 = smul.u32 4, %s23
        %p337 = scmp.lt.s32.totalorder %s336, 7
        %s338 = scalar_select %p337, %s336, 7
        %s339 = smul.addr %s338, 8
        %s340 = scalar_lea.vmem %s7, %s339
        %s341 = smul.u32 4, %s23
        %s342 = smul.u32 4, %s23
        %v343 = vld [vmem:[%s328] sm:$0xff]
        %v344 = vld [vmem:[%s328 + $0x8] sm:$0xff]
        %v345 = vld [vmem:[%s328 + $0x10] sm:$0xff]
        %v346 = vld [vmem:[%s328 + $0x18] sm:$0xff]
        %v347 = vand.u32 2147483647, %v343
        %v348 = vand.u32 2147483647, %v344
        %v349 = vand.u32 2147483647, %v345
        %v350 = vand.u32 2147483647, %v346
        %v351 = vlog2.pop %v347
        %v352 = vmul.f32 %v351, 0.6931472
        %v353 = vlog2.pop %v348
        %v354 = vmul.f32 %v353, 0.6931472
        %v355 = vlog2.pop %v349
        %v356 = vmul.f32 %v355, 0.6931472
        %v357 = vlog2.pop %v350
        %v358 = vmul.f32 %v357, 0.6931472
        %v359 = vmul.f32 %v352, 0.1
        %v360 = vmul.f32 %v354, 0.1
        %v361 = vmul.f32 %v356, 0.1
        %v362 = vmul.f32 %v358, 0.1
        %v363 = vmax.f32 %v359, -1.0
        %v364 = vmax.f32 %v360, -1.0
        %v365 = vmax.f32 %v361, -1.0
        %v366 = vmax.f32 %v362, -1.0
        %v367 = vmin.f32 %v363, 1.0
        %v368 = vmin.f32 %v364, 1.0
        %v369 = vmin.f32 %v365, 1.0
        %v370 = vmin.f32 %v366, 1.0
        %v371 = vmul.f32 %v343, 22026.465
        %v372 = vmul.f32 %v344, 22026.465
        %v373 = vmul.f32 %v345, 22026.465
        %v374 = vmul.f32 %v346, 22026.465
        %v375 = vmax.f32 %v371, -1.0
        %v376 = vmax.f32 %v372, -1.0
        %v377 = vmax.f32 %v373, -1.0
        %v378 = vmax.f32 %v374, -1.0
        %v379 = vmin.f32 %v375, 1.0
        %v380 = vmin.f32 %v376, 1.0
        %v381 = vmin.f32 %v377, 1.0
        %v382 = vmin.f32 %v378, 1.0
        %v383 = vld [vmem:[%s2] sm:$0xff]
        %v384 = vld [vmem:[%s2 + $0x8] sm:$0xff]
        %v385 = vld [vmem:[%s2 + $0x10] sm:$0xf]
        %390 = vrot.lane.b32.xlu0 %v379, 10
        %v391 = vpop.permute.xlu0 %390
        %392 = vrot.lane.b32.xlu0 %v380, 10
        %v393 = vpop.permute.xlu0 %392
        %394 = vrot.lane.b32.xlu0 %v381, 10
        %v395 = vpop.permute.xlu0 %394
        %396 = vrot.lane.b32.xlu0 %v382, 10
        %v397 = vpop.permute.xlu0 %396
        %vm402 = vcmask 80896
        %v403 = vsel %vm402, %v367, %v391
        %v404 = vsel %vm402, %v368, %v393
        %v405 = vsel %vm402, %v369, %v395
        %v406 = vsel %vm402, %v370, %v397
        %v407 = vld [vmem:[%s4] sm:$0x1]
        %v409 = vlaneseq
        %v410 = vshrl.u32 %v409, 7
        %v411 = vsub.s32 0, %v410
        %v412 = vrot.slane %v407, %v411
        %vm414 = vcmask 162816
        %v416 = vsel %vm414, %v403, 0
        %v419 = vsel %vm414, %v404, 0
        %v422 = vsel %vm414, %v405, 0
        %v425 = vsel %vm414, %v406, 0
        %vm427 = vcmask 1043456
        %v429 = vsel %vm427, %v385, 0
        %431 = vmatprep.subr.mxu0 0.0
        %432 = vmatpush1.msra.mxu0 %v383
        %433 = vmatprep.subr.mxu0 0.0
        %434 = vmatpush1.msra.mxu0 %v384
        %435 = vmatprep.subr.mxu0 0.0
        %436 = vmatpush1.msra.mxu0 %v429
        %437 = vmatprep.subr.mxu0 0.0
        %438 = vmatpush1.msra.mxu0 0.0
        %439 = vmatprep.subr.mxu0 0.0
        %440 = vmatpush1.msra.mxu0 0.0
        %441 = vmatprep.subr.mxu0 0.0
        %442 = vmatpush1.msra.mxu0 0.0
        %443 = vmatprep.subr.mxu0 0.0
        %444 = vmatpush1.msra.mxu0 0.0
        %445 = vmatprep.subr.mxu0 0.0
        %446 = vmatpush1.msra.mxu0 0.0
        %447 = vmatprep.subr.mxu0 0.0
        %448 = vmatpush1.msra.mxu0 0.0
        %449 = vmatprep.subr.mxu0 0.0
        %450 = vmatpush1.msra.mxu0 0.0
        %451 = vmatprep.subr.mxu0 0.0
        %452 = vmatpush1.msra.mxu0 0.0
        %453 = vmatprep.subr.mxu0 0.0
        %454 = vmatpush1.msra.mxu0 0.0
        %455 = vmatprep.subr.mxu0 0.0
        %456 = vmatpush1.msra.mxu0 0.0
        %457 = vmatprep.subr.mxu0 0.0
        %458 = vmatpush1.msra.mxu0 0.0
        %459 = vmatprep.subr.mxu0 0.0
        %460 = vmatpush1.msra.mxu0 0.0
        %461 = vmatprep.subr.mxu0 0.0
        %462 = vmatpush1.msra.mxu0 0.0
        %463 = vmatprep.subr.mxu0 0.0
        %464 = vmatpush1.msra.mxu0 0.0
        %465 = vmatprep.subr.mxu0 0.0
        %466 = vmatpush1.msra.mxu0 0.0
        %467 = vmatprep.subr.mxu0 0.0
        %468 = vmatpush1.msra.mxu0 0.0
        %469 = vmatprep.subr.mxu0 0.0
        %470 = vmatpush1.msra.mxu0 0.0
        %471 = vmatprep.subr.mxu0 0.0
        %472 = vmatpush1.msra.mxu0 0.0
        %473 = vmatprep.subr.mxu0 0.0
        %474 = vmatpush1.msra.mxu0 0.0
        %475 = vmatprep.subr.mxu0 0.0
        %476 = vmatpush1.msra.mxu0 0.0
        %477 = vmatprep.subr.mxu0 0.0
        %478 = vmatpush1.msra.mxu0 0.0
        %479 = vmatprep.subr.mxu0 0.0
        %480 = vmatpush1.msra.mxu0 0.0
        %481 = vmatprep.subr.mxu0 0.0
        %482 = vmatpush1.msra.mxu0 0.0
        %483 = vmatprep.subr.mxu0 0.0
        %484 = vmatpush1.msra.mxu0 0.0
        %485 = vmatprep.subr.mxu0 0.0
        %486 = vmatpush1.msra.mxu0 0.0
        %487 = vmatprep.subr.mxu0 0.0
        %488 = vmatpush1.msra.mxu0 0.0
        %489 = vmatprep.subr.mxu0 0.0
        %490 = vmatpush1.msra.mxu0 0.0
        %491 = vmatprep.subr.mxu0 0.0
        %492 = vmatpush1.msra.mxu0 0.0
        %493 = vmatprep.subr.mxu0 0.0
        %494 = vmatpush1.msra.mxu0 0.0
        %495 = vmatprep.mubr.f32.mxu0 0.0
        %496 = vmatmul.mubr.f32.gmra.mrb[0].mxu0 %v416
        %v497 = vpop.f32.mrb[0].mxu0
        %v498 = vadd.f32 %v412, %v497
        %v499 = vpop.f32.mrb[0].mxu0
        %500 = vmatprep.mubr.f32.mxu0 0.0
        %501 = vmatmul.mubr.f32.gmra.mrb[0].mxu0 %v419
        %v502 = vpop.f32.mrb[0].mxu0
        %v503 = vadd.f32 %v412, %v502
        %v504 = vpop.f32.mrb[0].mxu0
        %505 = vmatprep.mubr.f32.mxu0 0.0
        %506 = vmatmul.mubr.f32.gmra.mrb[0].mxu0 %v422
        %v507 = vpop.f32.mrb[0].mxu0
        %v508 = vadd.f32 %v412, %v507
        %v509 = vpop.f32.mrb[0].mxu0
        %510 = vmatprep.mubr.f32.mxu0 0.0
        %511 = vmatmul.mubr.f32.gmra.mrb[0].mxu0 %v425
        %v512 = vpop.f32.mrb[0].mxu0
        %v513 = vadd.f32 %v412, %v512
        %v514 = vpop.f32.mrb[0].mxu0
        %515 = vdwg.mxu0
        %v516 = vxor.u32 %v498, 2147483648
        %v517 = vxor.u32 %v503, 2147483648
        %v518 = vxor.u32 %v508, 2147483648
        %v519 = vxor.u32 %v513, 2147483648
        %v520 = vmul.f32 %v516, 1.442695
        %v521 = vpow.pop %v520
        %v522 = vmul.f32 %v517, 1.442695
        %v523 = vpow.pop %v522
        %v524 = vmul.f32 %v518, 1.442695
        %v525 = vpow.pop %v524
        %v526 = vmul.f32 %v519, 1.442695
        %v527 = vpow.pop %v526
        %v528 = vadd.f32 %v521, 1.0
        %v529 = vadd.f32 %v523, 1.0
        %v530 = vadd.f32 %v525, 1.0
        %v531 = vadd.f32 %v527, 1.0
        %v532 = vrcp.pop %v528
        %v533 = vmul.f32 1.0, %v532
        %v534 = vrcp.pop %v529
        %v535 = vmul.f32 1.0, %v534
        %v536 = vrcp.pop %v530
        %v537 = vmul.f32 1.0, %v536
        %v538 = vrcp.pop %v531
        %v539 = vmul.f32 1.0, %v538
        %v540 = vmul.f32 %v533, 2.0
        %v541 = vmul.f32 %v535, 2.0
        %v542 = vmul.f32 %v537, 2.0
        %v543 = vmul.f32 %v539, 2.0
        %v544 = vsub.f32 %v540, 1.0
        %v545 = vsub.f32 %v541, 1.0
        %v546 = vsub.f32 %v542, 1.0
        %v547 = vsub.f32 %v543, 1.0
        %552 = vrot.lane.b32.xlu0 %v544, 64
        %v553 = vpop.permute.xlu0 %552
        %554 = vrot.lane.b32.xlu0 %v545, 64
        %v555 = vpop.permute.xlu0 %554
        %556 = vrot.lane.b32.xlu0 %v546, 64
        %v557 = vpop.permute.xlu0 %556
        %558 = vrot.lane.b32.xlu0 %v547, 64
        %v559 = vpop.permute.xlu0 %558
        %v564 = vmul.f32 %v533, %v553
        %v565 = vmul.f32 %v535, %v555
        %v566 = vmul.f32 %v537, %v557
        %v567 = vmul.f32 %v539, %v559
        %v568 = vtanh.pop %v564
        %v569 = vtanh.pop %v565
        %v570 = vtanh.pop %v566
        %v571 = vtanh.pop %v567
        %576 = vrot.lane.b32.xlu0 %v568, 96
        %v577 = vpop.permute.xlu0 %576
        %578 = vrot.lane.b32.xlu0 %v569, 96
        %v579 = vpop.permute.xlu0 %578
        %580 = vrot.lane.b32.xlu0 %v570, 96
        %v581 = vpop.permute.xlu0 %580
        %582 = vrot.lane.b32.xlu0 %v571, 96
        %v583 = vpop.permute.xlu0 %582
        %v588 = vmul.f32 %v533, %v577
        %v589 = vmul.f32 %v535, %v579
        %v590 = vmul.f32 %v537, %v581
        %v591 = vmul.f32 %v539, %v583
        %v592 = vld [vmem:[%s3] sm:$0xff]
        %v593 = vld [vmem:[%s3 + $0x8] sm:$0xff]
        %v594 = vld [vmem:[%s3 + $0x10] sm:$0xff]
        %v595 = vld [vmem:[%s3 + $0x18] sm:$0xff]
        %s596 = scalar_lea.vmem %s4, 1
        %v597 = vld [vmem:[%s596] sm:$0x1]
        %v599 = vlaneseq
        %v600 = vshrl.u32 %v599, 7
        %v601 = vsub.s32 0, %v600
        %v602 = vrot.slane %v597, %v601
        %608 = vrot.lane.b32.xlu0 %v588, 32
        %v609 = vpop.permute.xlu0 %608
        %610 = vrot.lane.b32.xlu0 %v589, 32
        %v611 = vpop.permute.xlu0 %610
        %612 = vrot.lane.b32.xlu0 %v590, 32
        %v613 = vpop.permute.xlu0 %612
        %614 = vrot.lane.b32.xlu0 %v591, 32
        %v615 = vpop.permute.xlu0 %614
        %vm616 = vcmask 261120
        %v617 = vsel %vm616, %v609, 0
        %v619 = vsel %vm616, %v611, 0
        %v621 = vsel %vm616, %v613, 0
        %v623 = vsel %vm616, %v615, 0
        %625 = vmatprep.subr.mxu0 0.0
        %626 = vmatpush1.msra.mxu0 %v592
        %627 = vmatprep.subr.mxu0 0.0
        %628 = vmatpush1.msra.mxu0 %v593
        %629 = vmatprep.subr.mxu0 0.0
        %630 = vmatpush1.msra.mxu0 %v594
        %631 = vmatprep.subr.mxu0 0.0
        %632 = vmatpush1.msra.mxu0 %v595
        %633 = vmatprep.subr.mxu0 0.0
        %634 = vmatpush1.msra.mxu0 0.0
        %635 = vmatprep.subr.mxu0 0.0
        %636 = vmatpush1.msra.mxu0 0.0
        %637 = vmatprep.subr.mxu0 0.0
        %638 = vmatpush1.msra.mxu0 0.0
        %639 = vmatprep.subr.mxu0 0.0
        %640 = vmatpush1.msra.mxu0 0.0
        %641 = vmatprep.subr.mxu0 0.0
        %642 = vmatpush1.msra.mxu0 0.0
        %643 = vmatprep.subr.mxu0 0.0
        %644 = vmatpush1.msra.mxu0 0.0
        %645 = vmatprep.subr.mxu0 0.0
        %646 = vmatpush1.msra.mxu0 0.0
        %647 = vmatprep.subr.mxu0 0.0
        %648 = vmatpush1.msra.mxu0 0.0
        %649 = vmatprep.subr.mxu0 0.0
        %650 = vmatpush1.msra.mxu0 0.0
        %651 = vmatprep.subr.mxu0 0.0
        %652 = vmatpush1.msra.mxu0 0.0
        %653 = vmatprep.subr.mxu0 0.0
        %654 = vmatpush1.msra.mxu0 0.0
        %655 = vmatprep.subr.mxu0 0.0
        %656 = vmatpush1.msra.mxu0 0.0
        %657 = vmatprep.subr.mxu0 0.0
        %658 = vmatpush1.msra.mxu0 0.0
        %659 = vmatprep.subr.mxu0 0.0
        %660 = vmatpush1.msra.mxu0 0.0
        %661 = vmatprep.subr.mxu0 0.0
        %662 = vmatpush1.msra.mxu0 0.0
        %663 = vmatprep.subr.mxu0 0.0
        %664 = vmatpush1.msra.mxu0 0.0
        %665 = vmatprep.subr.mxu0 0.0
        %666 = vmatpush1.msra.mxu0 0.0
        %667 = vmatprep.subr.mxu0 0.0
        %668 = vmatpush1.msra.mxu0 0.0
        %669 = vmatprep.subr.mxu0 0.0
        %670 = vmatpush1.msra.mxu0 0.0
        %671 = vmatprep.subr.mxu0 0.0
        %672 = vmatpush1.msra.mxu0 0.0
        %673 = vmatprep.subr.mxu0 0.0
        %674 = vmatpush1.msra.mxu0 0.0
        %675 = vmatprep.subr.mxu0 0.0
        %676 = vmatpush1.msra.mxu0 0.0
        %677 = vmatprep.subr.mxu0 0.0
        %678 = vmatpush1.msra.mxu0 0.0
        %679 = vmatprep.subr.mxu0 0.0
        %680 = vmatpush1.msra.mxu0 0.0
        %681 = vmatprep.subr.mxu0 0.0
        %682 = vmatpush1.msra.mxu0 0.0
        %683 = vmatprep.subr.mxu0 0.0
        %684 = vmatpush1.msra.mxu0 0.0
        %685 = vmatprep.subr.mxu0 0.0
        %686 = vmatpush1.msra.mxu0 0.0
        %687 = vmatprep.subr.mxu0 0.0
        %688 = vmatpush1.msra.mxu0 0.0
        %689 = vmatprep.mubr.f32.mxu0 0.0
        %690 = vmatmul.mubr.f32.gmra.mrb[0].mxu0 %v617
        %v691 = vpop.f32.mrb[0].mxu0
        %v692 = vadd.f32 %v602, %v691
        %v693 = vpop.f32.mrb[0].mxu0
        %694 = vmatprep.mubr.f32.mxu0 0.0
        %695 = vmatmul.mubr.f32.gmra.mrb[0].mxu0 %v619
        %v696 = vpop.f32.mrb[0].mxu0
        %v697 = vadd.f32 %v602, %v696
        %v698 = vpop.f32.mrb[0].mxu0
        %699 = vmatprep.mubr.f32.mxu0 0.0
        %700 = vmatmul.mubr.f32.gmra.mrb[0].mxu0 %v621
        %v701 = vpop.f32.mrb[0].mxu0
        %v702 = vadd.f32 %v602, %v701
        %v703 = vpop.f32.mrb[0].mxu0
        %704 = vmatprep.mubr.f32.mxu0 0.0
        %705 = vmatmul.mubr.f32.gmra.mrb[0].mxu0 %v623
        %v706 = vpop.f32.mrb[0].mxu0
        %v707 = vadd.f32 %v602, %v706
        %v708 = vpop.f32.mrb[0].mxu0
        %709 = vdwg.mxu0
        %v710 = vxor.u32 %v692, 2147483648
        %v711 = vxor.u32 %v697, 2147483648
        %v712 = vxor.u32 %v702, 2147483648
        %v713 = vxor.u32 %v707, 2147483648
        %v714 = vmul.f32 %v710, 1.442695
        %v715 = vpow.pop %v714
        %v716 = vmul.f32 %v711, 1.442695
        %v717 = vpow.pop %v716
        %v718 = vmul.f32 %v712, 1.442695
        %v719 = vpow.pop %v718
        %v720 = vmul.f32 %v713, 1.442695
        %v721 = vpow.pop %v720
        %v722 = vadd.f32 %v715, 1.0
        %v723 = vadd.f32 %v717, 1.0
        %v724 = vadd.f32 %v719, 1.0
        %v725 = vadd.f32 %v721, 1.0
        %v726 = vrcp.pop %v722
        %v727 = vmul.f32 1.0, %v726
        %v728 = vrcp.pop %v723
        %v729 = vmul.f32 1.0, %v728
        %v730 = vrcp.pop %v724
        %v731 = vmul.f32 1.0, %v730
        %v732 = vrcp.pop %v725
        %v733 = vmul.f32 1.0, %v732
        %v734 = vmul.f32 %v727, 2.0
        %v735 = vmul.f32 %v729, 2.0
        %v736 = vmul.f32 %v731, 2.0
        %v737 = vmul.f32 %v733, 2.0
        %v738 = vsub.f32 %v734, 1.0
        %v739 = vsub.f32 %v735, 1.0
        %v740 = vsub.f32 %v736, 1.0
        %v741 = vsub.f32 %v737, 1.0
        %746 = vrot.lane.b32.xlu0 %v738, 64
        %v747 = vpop.permute.xlu0 %746
        %748 = vrot.lane.b32.xlu0 %v739, 64
        %v749 = vpop.permute.xlu0 %748
        %750 = vrot.lane.b32.xlu0 %v740, 64
        %v751 = vpop.permute.xlu0 %750
        %752 = vrot.lane.b32.xlu0 %v741, 64
        %v753 = vpop.permute.xlu0 %752
        %v758 = vmul.f32 %v727, %v747
        %v759 = vmul.f32 %v729, %v749
        %v760 = vmul.f32 %v731, %v751
        %v761 = vmul.f32 %v733, %v753
        %v762 = vtanh.pop %v758
        %v763 = vtanh.pop %v759
        %v764 = vtanh.pop %v760
        %v765 = vtanh.pop %v761
        %770 = vrot.lane.b32.xlu0 %v762, 96
        %v771 = vpop.permute.xlu0 %770
        %772 = vrot.lane.b32.xlu0 %v763, 96
        %v773 = vpop.permute.xlu0 %772
        %774 = vrot.lane.b32.xlu0 %v764, 96
        %v775 = vpop.permute.xlu0 %774
        %776 = vrot.lane.b32.xlu0 %v765, 96
        %v777 = vpop.permute.xlu0 %776
        %v782 = vmul.f32 %v727, %v771
        %v783 = vmul.f32 %v729, %v773
        %v784 = vmul.f32 %v731, %v775
        %v785 = vmul.f32 %v733, %v777
        %794 = vrot.lane.b32.xlu0 %v782, 64
        %v795 = vpop.permute.xlu0 %794
        %796 = vrot.lane.b32.xlu0 %v783, 64
        %v797 = vpop.permute.xlu0 %796
        %798 = vrot.lane.b32.xlu0 %v784, 64
        %v799 = vpop.permute.xlu0 %798
        %800 = vrot.lane.b32.xlu0 %v785, 64
        %v801 = vpop.permute.xlu0 %800
        %810 = vrot.lane.b32.xlu0 %v564, 64
        %v811 = vpop.permute.xlu0 %810
        %812 = vrot.lane.b32.xlu0 %v565, 64
        %v813 = vpop.permute.xlu0 %812
        %814 = vrot.lane.b32.xlu0 %v566, 64
        %v815 = vpop.permute.xlu0 %814
        %816 = vrot.lane.b32.xlu0 %v567, 64
        %v817 = vpop.permute.xlu0 %816
        %826 = vrot.lane.b32.xlu0 %v758, 96
        %v827 = vpop.permute.xlu0 %826
        %828 = vrot.lane.b32.xlu0 %v759, 96
        %v829 = vpop.permute.xlu0 %828
        %830 = vrot.lane.b32.xlu0 %v760, 96
        %v831 = vpop.permute.xlu0 %830
        %832 = vrot.lane.b32.xlu0 %v761, 96
        %v833 = vpop.permute.xlu0 %832
        %v838 = vsel %vm616, %v609, %v795
        %v839 = vsel %vm616, %v611, %v797
        %v840 = vsel %vm616, %v613, %v799
        %v841 = vsel %vm616, %v615, %v801
        %vm842 = vcmask 523264
        %v843 = vsel %vm842, %v838, %v811
        %v844 = vsel %vm842, %v839, %v813
        %v845 = vsel %vm842, %v840, %v815
        %v846 = vsel %vm842, %v841, %v817
        %vm847 = vcmask 785408
        %v848 = vsel %vm847, %v843, %v827
        %v849 = vsel %vm847, %v844, %v829
        %v850 = vsel %vm847, %v845, %v831
        %v851 = vsel %vm847, %v846, %v833
        %852 = vst [vmem:[%s323] sm:$0xff] %v848
        %853 = vst [vmem:[%s323 + $0x8] sm:$0xff] %v849
        %854 = vst [vmem:[%s323 + $0x10] sm:$0xff] %v850
        %855 = vst [vmem:[%s323 + $0x18] sm:$0xff] %v851
        %v856 = vld [vmem:[%s5] sm:$0xff]
        %v857 = vld [vmem:[%s5 + $0x8] sm:$0xff]
        %v858 = vld [vmem:[%s5 + $0x10] sm:$0xff]
        %v859 = vld [vmem:[%s5 + $0x18] sm:$0xff]
        %v860 = vld [vmem:[%s6] sm:$0x1]
        %v862 = vlaneseq
        %v863 = vshrl.u32 %v862, 7
        %v864 = vsub.s32 0, %v863
        %v865 = vrot.slane %v860, %v864
        %867 = vrot.lane.b32.xlu0 %v782, 32
        %v868 = vpop.permute.xlu0 %867
        %869 = vrot.lane.b32.xlu0 %v783, 32
        %v870 = vpop.permute.xlu0 %869
        %871 = vrot.lane.b32.xlu0 %v784, 32
        %v872 = vpop.permute.xlu0 %871
        %873 = vrot.lane.b32.xlu0 %v785, 32
        %v874 = vpop.permute.xlu0 %873
        %v875 = vsel %vm616, %v868, 0
        %v877 = vsel %vm616, %v870, 0
        %v879 = vsel %vm616, %v872, 0
        %v881 = vsel %vm616, %v874, 0
        %883 = vmatprep.subr.mxu0 0.0
        %884 = vmatpush1.msra.mxu0 %v856
        %885 = vmatprep.subr.mxu0 0.0
        %886 = vmatpush1.msra.mxu0 %v857
        %887 = vmatprep.subr.mxu0 0.0
        %888 = vmatpush1.msra.mxu0 %v858
        %889 = vmatprep.subr.mxu0 0.0
        %890 = vmatpush1.msra.mxu0 %v859
        %891 = vmatprep.subr.mxu0 0.0
        %892 = vmatpush1.msra.mxu0 0.0
        %893 = vmatprep.subr.mxu0 0.0
        %894 = vmatpush1.msra.mxu0 0.0
        %895 = vmatprep.subr.mxu0 0.0
        %896 = vmatpush1.msra.mxu0 0.0
        %897 = vmatprep.subr.mxu0 0.0
        %898 = vmatpush1.msra.mxu0 0.0
        %899 = vmatprep.subr.mxu0 0.0
        %900 = vmatpush1.msra.mxu0 0.0
        %901 = vmatprep.subr.mxu0 0.0
        %902 = vmatpush1.msra.mxu0 0.0
        %903 = vmatprep.subr.mxu0 0.0
        %904 = vmatpush1.msra.mxu0 0.0
        %905 = vmatprep.subr.mxu0 0.0
        %906 = vmatpush1.msra.mxu0 0.0
        %907 = vmatprep.subr.mxu0 0.0
        %908 = vmatpush1.msra.mxu0 0.0
        %909 = vmatprep.subr.mxu0 0.0
        %910 = vmatpush1.msra.mxu0 0.0
        %911 = vmatprep.subr.mxu0 0.0
        %912 = vmatpush1.msra.mxu0 0.0
        %913 = vmatprep.subr.mxu0 0.0
        %914 = vmatpush1.msra.mxu0 0.0
        %915 = vmatprep.subr.mxu0 0.0
        %916 = vmatpush1.msra.mxu0 0.0
        %917 = vmatprep.subr.mxu0 0.0
        %918 = vmatpush1.msra.mxu0 0.0
        %919 = vmatprep.subr.mxu0 0.0
        %920 = vmatpush1.msra.mxu0 0.0
        %921 = vmatprep.subr.mxu0 0.0
        %922 = vmatpush1.msra.mxu0 0.0
        %923 = vmatprep.subr.mxu0 0.0
        %924 = vmatpush1.msra.mxu0 0.0
        %925 = vmatprep.subr.mxu0 0.0
        %926 = vmatpush1.msra.mxu0 0.0
        %927 = vmatprep.subr.mxu0 0.0
        %928 = vmatpush1.msra.mxu0 0.0
        %929 = vmatprep.subr.mxu0 0.0
        %930 = vmatpush1.msra.mxu0 0.0
        %931 = vmatprep.subr.mxu0 0.0
        %932 = vmatpush1.msra.mxu0 0.0
        %933 = vmatprep.subr.mxu0 0.0
        %934 = vmatpush1.msra.mxu0 0.0
        %935 = vmatprep.subr.mxu0 0.0
        %936 = vmatpush1.msra.mxu0 0.0
        %937 = vmatprep.subr.mxu0 0.0
        %938 = vmatpush1.msra.mxu0 0.0
        %939 = vmatprep.subr.mxu0 0.0
        %940 = vmatpush1.msra.mxu0 0.0
        %941 = vmatprep.subr.mxu0 0.0
        %942 = vmatpush1.msra.mxu0 0.0
        %943 = vmatprep.subr.mxu0 0.0
        %944 = vmatpush1.msra.mxu0 0.0
        %945 = vmatprep.subr.mxu0 0.0
        %946 = vmatpush1.msra.mxu0 0.0
        %947 = vmatprep.mubr.f32.mxu0 0.0
        %948 = vmatmul.mubr.f32.gmra.mrb[0].mxu0 %v875
        %v949 = vpop.f32.mrb[0].mxu0
        %v950 = vadd.f32 %v865, %v949
        %v951 = vpop.f32.mrb[0].mxu0
        %952 = vmatprep.mubr.f32.mxu0 0.0
        %953 = vmatmul.mubr.f32.gmra.mrb[0].mxu0 %v877
        %v954 = vpop.f32.mrb[0].mxu0
        %v955 = vadd.f32 %v865, %v954
        %v956 = vpop.f32.mrb[0].mxu0
        %957 = vmatprep.mubr.f32.mxu0 0.0
        %958 = vmatmul.mubr.f32.gmra.mrb[0].mxu0 %v879
        %v959 = vpop.f32.mrb[0].mxu0
        %v960 = vadd.f32 %v865, %v959
        %v961 = vpop.f32.mrb[0].mxu0
        %962 = vmatprep.mubr.f32.mxu0 0.0
        %963 = vmatmul.mubr.f32.gmra.mrb[0].mxu0 %v881
        %v964 = vpop.f32.mrb[0].mxu0
        %v965 = vadd.f32 %v865, %v964
        %v966 = vpop.f32.mrb[0].mxu0
        %967 = vdwg.mxu0
        %v968 = vmul.f32 %v950, 1e-05
        %v969 = vmul.f32 %v955, 1e-05
        %v970 = vmul.f32 %v960, 1e-05
        %v971 = vmul.f32 %v965, 1e-05
        %v972 = vld [vmem:[%s334] sm:$0xff]
        %v973 = vld [vmem:[%s334 + $0x8] sm:$0xff]
        %v974 = vld [vmem:[%s334 + $0x10] sm:$0xff]
        %v975 = vld [vmem:[%s334 + $0x18] sm:$0xff]
        %v976 = vadd.f32 %v972, %v968
        %v977 = vadd.f32 %v973, %v969
        %v978 = vadd.f32 %v974, %v970
        %v979 = vadd.f32 %v975, %v971
        %980 = vst.msk [vmem:[%s340] sm:$0xff] %vm402, %v976
        %981 = vst.msk [vmem:[%s340 + $0x8] sm:$0xff] %vm402, %v977
        %982 = vst.msk [vmem:[%s340 + $0x10] sm:$0xff] %vm402, %v978
        %983 = vst.msk [vmem:[%s340 + $0x18] sm:$0xff] %vm402, %v979
        %s984 = smul.u32 4, %s23
        %p985 = scmp.lt.s32.totalorder %s984, 7
        %s986 = scalar_select %p985, %s984, 7
        %s987 = smul.addr %s986, 8
        %s988 = scalar_lea.vmem %s7, %s987
        %s989 = sand.u32 %s214, 1
        %s990 = scalar_lea.sflag [#allocation3], %s989
        %s991 = sand.u32 %s214, 1
        %s992 = smul.addr %s991, 32
        %s993 = scalar_lea.vmem [#allocation2], %s992
        // Predicated region
        $region49: #{tpu_custom_call.1} parent=47 // pred_check
          %p994 = pneg %p198
        $region50: #{tpu_custom_call.1} parent=47 // pred_check_branch
          %996 = sbr.rel (%p994) target = $region52
        $region51: #{tpu_custom_call.1} parent=47 // pred_region
          %s997 = smul.u32 4, %s23
        $region52: #{tpu_custom_call.1} parent=47 // pred_fallthru
          _
        // Predicated region
        $region53: #{tpu_custom_call.1} parent=47 // pred_check
          %p998 = pneg %p224
        $region54: #{tpu_custom_call.1} parent=47 // pred_check_branch
          %1000 = sbr.rel (%p998) target = $region56
        $region55: #{tpu_custom_call.1} parent=47 // pred_region
          %s1001 = smul.u32 4, %s23
          %s1003 = ssub.s32 512, 512
          %1004 = vsyncadd %s990, %s1003
          %s1005 = smul.addr %s1001, 128
          %s1006 = scalar_lea.hbm %s8, %s1005
          %s1007 = sshll.u32 %s993, 4
          %s1008 = int_to_ptr.vmem [resolvable:$true] %s1007
          %1013 = dma.vmem_to_hbm [thread:$0]  %s1008, 512, %s1006, %s990, 128, 128, 8
        $region56: #{tpu_custom_call.1} parent=47 // pred_fallthru
          _
      $region48: #{tpu_custom_call.1} parent=5 // pred_fallthru
        _
      %p1014 = scmp.le.s32.totalorder 2, %s18
      // Predicated region
      $region57: #{tpu_custom_call.1} parent=5 // pred_check
        %p1015 = pneg %p1014
      $region58: #{tpu_custom_call.1} parent=5 // pred_check_branch
        %1017 = sbr.rel (%p1015) target = $region60
      $region59: #{tpu_custom_call.1} parent=5 // pred_region
        %s1018 = ssub.s32 %s18, 2
        // Predicated region
        $region61: #{tpu_custom_call.1} parent=59 // pred_check
          %p1019 = pneg %p204
        $region62: #{tpu_custom_call.1} parent=59 // pred_check_branch
          %1021 = sbr.rel (%p1019) target = $region64
        $region63: #{tpu_custom_call.1} parent=59 // pred_region
          %s1022 = smul.u32 4, %s24
          %p1023 = scmp.lt.s32.totalorder %s1022, 7
          %s1024 = scalar_select %p1023, %s1022, 7
          %s1025 = smul.addr %s1024, 8
          %s1026 = scalar_lea.vmem %s7, %s1025
        $region64: #{tpu_custom_call.1} parent=59 // pred_fallthru
          _
        // Predicated region
        $region65: #{tpu_custom_call.1} parent=59 // pred_check
          %p1027 = pneg %p230
        $region66: #{tpu_custom_call.1} parent=59 // pred_check_branch
          %1029 = sbr.rel (%p1027) target = $region68
        $region67: #{tpu_custom_call.1} parent=59 // pred_region
          %s1030 = sand.u32 %s215, 1
          %s1031 = scalar_lea.sflag [#allocation3], %s1030
          %s1032 = sand.u32 %s215, 1
          %s1033 = smul.addr %s1032, 32
          %s1034 = scalar_lea.vmem [#allocation2], %s1033
          %1035 = dma.done %s1031, 512
        $region68: #{tpu_custom_call.1} parent=59 // pred_fallthru
          _
      $region60: #{tpu_custom_call.1} parent=5 // pred_fallthru
        _
    $region6: #{tpu_custom_call.1} parent=1 // loop_footer
      %s22 = sadd.s32 1, %s18
    $region7: #{tpu_custom_call.1} parent=1 // loop_footer_branch
      %17 = sbr.rel target = $region3
    $region8: #{tpu_custom_call.1} parent=1 // loop_exit
      _
    %1036 = vsyncpa [#allocation3], 1
    %s1037 = scalar_lea.sflag [#allocation3], 1
    %1038 = vsyncpa %s1037, 1

</llo_original>
